<compile_context>
chip_gen: v5e
topology: v5e:2x2
jax: 0.10.0
libtpu: 0.0.40
codegen_flags: <defaults>
</compile_context>

<pallas_src>
import functools

import jax
import jax.numpy as jnp
from jax import lax
from jax.experimental import pallas as pl
from jax.experimental.pallas import tpu as pltpu


_MAX_BLOCK_BYTES = 8 * 1024 * 1024       # per-input, per-buffer cap (native dtype)
_MAX_LANE_W_RAGGED = 8192                # lane-width cap for the ragged (free-reshape) path
_DEFAULT_VMEM_CAP = 64 * 1024 * 1024     # conservative fallback (v7x: 64 MiB / TC)


def _vmem_capacity_bytes():
    """Best-effort trace-time VMEM capacity query (falls back to v7x's 64 MiB)."""
    try:
        cap = getattr(pltpu.get_tpu_info(), "vmem_capacity_bytes", None)
        if cap:
            return int(cap)
    except Exception:
        pass
    return _DEFAULT_VMEM_CAP


def _block_plan(rows, lane_w, itemsize, cap_rows):
    """Byte-based block sizing with generation-aware VMEM budgeting."""
    vmem_cap = _vmem_capacity_bytes()
    # 2 inputs x 2 pipeline buffers dominate VMEM use; keep >=25% headroom for
    # the tiny (8, lane_w) accumulator, loop temporaries and compiler scratch.
    per_input_bytes = min(_MAX_BLOCK_BYTES, (vmem_cap * 3 // 4) // 4)
    budget_rows = max(8, per_input_bytes // (lane_w * itemsize))
    if cap_rows is not None:
        budget_rows = min(budget_rows, max(8, int(cap_rows)))
    budget_rows = max(8, (budget_rows // 8) * 8)       # keep 8-row groups
    block_rows = rows if rows <= budget_rows else budget_rows
    block_bytes = block_rows * lane_w * itemsize
    vmem_limit = int(min(vmem_cap,
                         max(32 * 1024 * 1024, 4 * block_bytes + 16 * 1024 * 1024)))
    return block_rows, vmem_limit


def _make_kernel(loss_type, block_rows, lane_w, nb, grouped, has_tail, tail_valid):
    """Streams (block_rows, lane_w) blocks, accumulating |d| or d^2 into a small
    (acc_rows, lane_w) f32 resident output block."""
    is_l1 = loss_type == "l1"

    def _elemwise(a, b):
        d = a.astype(jnp.float32) - b.astype(jnp.float32)
        return jnp.abs(d) if is_l1 else d * d

    def kernel(out_ref, gt_ref, acc_ref):
        i = pl.program_id(0)

        @pl.when(i == 0)
        def _init():
            acc_ref[...] = jnp.zeros_like(acc_ref)

        def block_partial(row_limit):
            # row_limit is a static Python int (only used for the tail block),
            # or None for fully-valid blocks.
            if grouped:
                n_groups = block_rows // 8

                def body(g, carry):
                    r0 = pl.multiple_of(g * 8, 8)
                    v = _elemwise(out_ref[pl.ds(r0, 8), :],
                                  gt_ref[pl.ds(r0, 8), :])
                    if row_limit is not None:
                        rid = lax.broadcasted_iota(jnp.int32, v.shape, 0) + r0
                        v = jnp.where(rid < row_limit, v, 0.0)
                    return carry + v

                return lax.fori_loop(0, n_groups, body,
                                     jnp.zeros((8, lane_w), jnp.float32))
            # Single full-extent block whose row count is not a multiple of 8:
            # reduce along the sublane axis (never has a ragged tail).
            v = _elemwise(out_ref[...], gt_ref[...])
            return jnp.sum(v, axis=0, keepdims=True)

        if has_tail:
            # Mask only the (single) tail block; full blocks keep the minimal path.
            @pl.when(i < nb - 1)
            def _full():
                acc_ref[...] += block_partial(None)

            @pl.when(i == nb - 1)
            def _tail():
                acc_ref[...] += block_partial(tail_valid)
        else:
            acc_ref[...] += block_partial(None)

    return kernel


@functools.partial(jax.jit, static_argnames=("loss_type", "block_rows_cap"))
def reconstruction_loss(out, gt, loss_type: str = "l1", block_rows_cap=None):
    """Pallas-backed equivalent of ReconstructionLoss(loss_type)(out, gt)."""
    if loss_type not in ("l1", "l2"):
        raise ValueError(f'No such type of ReconstructionLoss: "{loss_type}"')
    if out.shape != gt.shape:
        raise ValueError("out / gt must have identical shapes")

    n_elems = out.size
    shp = out.shape if out.ndim > 0 else (1,)
    itemsize = jnp.dtype(out.dtype).itemsize

    if n_elems % 128 == 0:
        # Common case: lane-dense 2-D view (free, contiguous reshape).
        lane_w = 128
        for cand in (1024, 512, 256, 128):
            if n_elems % cand == 0:
                lane_w = cand
                break
        rows = n_elems // lane_w
        out2d = out.reshape(rows, lane_w)
        gt2d = gt.reshape(rows, lane_w)
    else:
        # Ragged element count: fold trailing dims into the lane axis so the
        # reshape stays a free bitcast — no padded HBM copy of the inputs.
        lane_w = shp[-1]
        for d in reversed(shp[:-1]):
            if lane_w * d > _MAX_LANE_W_RAGGED:
                break
            lane_w *= d
        rows = n_elems // lane_w
        if 8 * lane_w * itemsize > _MAX_BLOCK_BYTES:
            # Pathological trailing dim: last-resort zero-padded flat view.
            # TODO(synk): this path costs one extra HBM copy of both inputs.
            lane_w = 128
            padded = pl.cdiv(n_elems, lane_w) * lane_w
            out2d = jnp.pad(out.reshape(-1), (0, padded - n_elems)).reshape(-1, lane_w)
            gt2d = jnp.pad(gt.reshape(-1), (0, padded - n_elems)).reshape(-1, lane_w)
            rows = padded // lane_w
        else:
            out2d = out.reshape(rows, lane_w)
            gt2d = gt.reshape(rows, lane_w)

    block_rows, vmem_limit = _block_plan(rows, lane_w, itemsize, block_rows_cap)
    nb = pl.cdiv(rows, block_rows)
    grouped = (block_rows % 8) == 0        # multi-block always implies grouped
    acc_rows = 8 if grouped else 1
    tail_valid = rows - (nb - 1) * block_rows
    has_tail = tail_valid < block_rows     # only possible when nb > 1

    acc = pl.pallas_call(
        _make_kernel(loss_type, block_rows, lane_w, nb, grouped, has_tail, tail_valid),
        out_shape=jax.ShapeDtypeStruct((acc_rows, lane_w), jnp.float32),
        grid_spec=pltpu.PrefetchScalarGridSpec(
            num_scalar_prefetch=0,
            grid=(nb,),
            in_specs=[
                pl.BlockSpec((block_rows, lane_w), lambda i: (i, 0)),
                pl.BlockSpec((block_rows, lane_w), lambda i: (i, 0)),
            ],
            # Tiny resident accumulator (same block every grid step).
            out_specs=pl.BlockSpec((acc_rows, lane_w), lambda i: (0, 0)),
        ),
        compiler_params=pltpu.CompilerParams(
            dimension_semantics=("arbitrary",),
            vmem_limit_bytes=vmem_limit,
        ),
    )(out2d, gt2d)

    # Tiny final reduction + mean over the *true* element count.
    total = jnp.sum(acc)
    return (total / jnp.float32(n_elems)).astype(jnp.float32)


if __name__ == "__main__":
    key = jax.random.PRNGKey(0)
    k1, k2, k3, k4 = jax.random.split(key, 4)

    # NCHW, small shapes: batch=2, channels=4, spatial=16x16.
    shape = (2, 4, 16, 16)
    out = jax.random.normal(k1, shape, dtype=jnp.float32)
    gt = jax.random.normal(k2, shape, dtype=jnp.float32)

    l1 = reconstruction_loss(out, gt, loss_type="l1")
    l2 = reconstruction_loss(out, gt, loss_type="l2")
    jax.block_until_ready((l1, l2))
    assert jnp.allclose(l1, jnp.mean(jnp.abs(out - gt)), rtol=1e-5, atol=1e-6), l1
    assert jnp.allclose(l2, jnp.mean((out - gt) ** 2), rtol=1e-5, atol=1e-6), l2

    # Ragged element count -> free-reshape lane path (no HBM pad copy).
    shape2 = (2, 3, 17, 19)
    out2 = jax.random.normal(k3, shape2, dtype=jnp.float32)
    gt2 = jax.random.normal(k4, shape2, dtype=jnp.float32)
    l1b = reconstruction_loss(out2, gt2, loss_type="l1")
    l2b = reconstruction_loss(out2, gt2, loss_type="l2")
    jax.block_until_ready((l1b, l2b))
    assert jnp.allclose(l1b, jnp.mean(jnp.abs(out2 - gt2)), rtol=1e-5, atol=1e-6)
    assert jnp.allclose(l2b, jnp.mean((out2 - gt2) ** 2), rtol=1e-5, atol=1e-6)

    # bf16 inputs: grouped (8-row) in-kernel reduction, single block.
    shape3 = (4, 8, 128, 130)
    out3 = jax.random.normal(k1, shape3, dtype=jnp.bfloat16)
    gt3 = jax.random.normal(k2, shape3, dtype=jnp.bfloat16)
    l2c = reconstruction_loss(out3, gt3, loss_type="l2")
    jax.block_until_ready(l2c)
    ref3 = jnp.mean((out3.astype(jnp.float32) - gt3.astype(jnp.float32)) ** 2)
    assert jnp.allclose(l2c, ref3, rtol=1e-3, atol=1e-5), (l2c, ref3)

    # Multi-block streaming path with a ragged, partially-masked tail block
    # (block_rows_cap forces several grid steps even at small test sizes).
    shape4 = (2, 617, 128)   # -> lane_w=256, rows=617, cap 64 -> 10 blocks, tail of 41 rows
    out4 = jax.random.normal(k3, shape4, dtype=jnp.float32)
    gt4 = jax.random.normal(k4, shape4, dtype=jnp.float32)
    l1d = reconstruction_loss(out4, gt4, loss_type="l1", block_rows_cap=64)
    l2d = reconstruction_loss(out4, gt4, loss_type="l2", block_rows_cap=64)
    jax.block_until_ready((l1d, l2d))
    assert jnp.allclose(l1d, jnp.mean(jnp.abs(out4 - gt4)), rtol=1e-5, atol=1e-6)
    assert jnp.allclose(l2d, jnp.mean((out4 - gt4) ** 2), rtol=1e-5, atol=1e-6)

    print("KERNEL_OK")
</pallas_src>

<mosaic_0001>
module attributes {stable_mosaic.version = 11 : i64} {
  func.func @kernel(%arg0: i32, %arg1: memref<2x1024xf32, #tpu.memory_space<vmem>>, %arg2: memref<2x1024xf32, #tpu.memory_space<vmem>>, %arg3: memref<1x1024xf32, #tpu.memory_space<vmem>>) attributes {dimension_semantics = [#tpu.dimension_semantics<arbitrary>], iteration_bounds = array<i64: 1>, scalar_prefetch = 0 : i64, scratch_operands = 0 : i64, tpu.core_type = #tpu.core_type<tc>, window_params = [{transform_indices = @transform_0, window_bounds = array<i64: 2, 1024>}, {transform_indices = @transform_1, window_bounds = array<i64: 2, 1024>}, {pipeline_mode = #tpu.pipeline_mode<synchronous>, transform_indices = @transform_2, window_bounds = array<i64: 1, 1024>}]} {
    %c0_i32 = arith.constant 0 : i32
    %0 = arith.cmpi eq, %arg0, %c0_i32 : i32
    %1 = arith.extui %0 : i1 to i32
    %c0_i32_0 = arith.constant 0 : i32
    %2 = arith.cmpi ne, %1, %c0_i32_0 : i32
    scf.if %2 {
      %cst_8 = arith.constant 0.000000e+00 : f32
      %12 = vector.broadcast %cst_8 : f32 to vector<1x1024xf32>
      %c0_9 = arith.constant 0 : index
      %c0_10 = arith.constant 0 : index
      %13 = vector.load %arg3[%c0_9, %c0_10] : memref<1x1024xf32, #tpu.memory_space<vmem>>, vector<1x1024xf32>
      tpu.vector_store %arg3[%c0_9, %c0_10], %12 {strides = array<i32>} : memref<1x1024xf32, #tpu.memory_space<vmem>>, vector<1x1024xf32>,
    } else {
    }
    %c0 = arith.constant 0 : index
    %c0_1 = arith.constant 0 : index
    %3 = vector.load %arg3[%c0, %c0_1] : memref<1x1024xf32, #tpu.memory_space<vmem>>, vector<1x1024xf32>
    %c0_2 = arith.constant 0 : index
    %c0_3 = arith.constant 0 : index
    %4 = vector.load %arg1[%c0_2, %c0_3] : memref<2x1024xf32, #tpu.memory_space<vmem>>, vector<2x1024xf32>
    %c0_4 = arith.constant 0 : index
    %c0_5 = arith.constant 0 : index
    %5 = vector.load %arg2[%c0_4, %c0_5] : memref<2x1024xf32, #tpu.memory_space<vmem>>, vector<2x1024xf32>
    %6 = arith.subf %4, %5 : vector<2x1024xf32>
    %7 = math.absf %6 : vector<2x1024xf32>
    %cst = arith.constant dense<0.000000e+00> : vector<1024xf32>
    %8 = vector.multi_reduction <add>, %7, %cst [0] : vector<2x1024xf32> to vector<1024xf32>
    %9 = vector.shape_cast %8 : vector<1024xf32> to vector<1x1024xf32>
    %10 = arith.addf %3, %9 : vector<1x1024xf32>
    %c0_6 = arith.constant 0 : index
    %c0_7 = arith.constant 0 : index
    %11 = vector.load %arg3[%c0_6, %c0_7] : memref<1x1024xf32, #tpu.memory_space<vmem>>, vector<1x1024xf32>
    tpu.vector_store %arg3[%c0_6, %c0_7], %10 {strides = array<i32>} : memref<1x1024xf32, #tpu.memory_space<vmem>>, vector<1x1024xf32>,
    return
  }
  func.func @transform_0(%arg0: i32) -> (i32, i32) {
    %c0_i32 = arith.constant 0 : i32
    %c0_i32_0 = arith.constant 0 : i32
    return %arg0, %c0_i32 : i32, i32
  }
  func.func @transform_1(%arg0: i32) -> (i32, i32) {
    %c0_i32 = arith.constant 0 : i32
    %c0_i32_0 = arith.constant 0 : i32
    return %arg0, %c0_i32 : i32, i32
  }
  func.func @transform_2(%arg0: i32) -> (i32, i32) {
    %c0_i32 = arith.constant 0 : i32
    %c0_i32_0 = arith.constant 0 : i32
    %c0_i32_1 = arith.constant 0 : i32
    return %c0_i32, %c0_i32_0 : i32, i32
  }
}

</mosaic_0001>

<llo_original>
// kernel: reconstruction_loss.1
$region0: #{reconstruction_loss.1}
  #allocation0 [shape = 'u32[]', space=smem, size = 0x4, offset = 0x4, fixed_abs, tag = 'smem constant byte address 0x4 - core index']
  #allocation1 [shape = 'u32[72,128]{1,0:T(1,128)}', space=vmem, size = 0x9000, scoped, tag = 'internal scratch']
  %s0 = inlined_call_operand.vmem [shape: f32[2,1024], index: 0, kind: input, shape index: {}]
  %s1 = inlined_call_operand.vmem [shape: f32[2,1024], index: 1, kind: input, shape index: {}]
  %s2 = inlined_call_operand.vmem [shape: f32[1,1024], index: 2, kind: output, shape index: {}]
  %s3 = sld [smem:[#allocation0]]
  $region22: #{reconstruction_loss.1} parent=0
    _
  %s5 = ssub.s32 1, %s3
  %s6 = scalar_select 0, %s5, %s3
  // Predicated region
  $region2: #{reconstruction_loss.1} parent=0 // pred_check
    _
  $region3: #{reconstruction_loss.1} parent=0 // pred_check_branch
    %8 = sbr.rel (0) target = $region5
  $region4: #{reconstruction_loss.1} parent=0 // pred_region
    _
  $region5: #{reconstruction_loss.1} parent=0 // pred_fallthru
    _
  // Predicated region
  $region6: #{reconstruction_loss.1} parent=0 // pred_check
    _
  $region7: #{reconstruction_loss.1} parent=0 // pred_check_branch
    %10 = sbr.rel (0) target = $region9
  $region8: #{reconstruction_loss.1} parent=0 // pred_region
    _
  $region9: #{reconstruction_loss.1} parent=0 // pred_fallthru
    _
  %p11 = scmp.eq.s32.totalorder 0, 0
  // Predicated region
  $region10: #{reconstruction_loss.1} parent=0 // pred_check
    %p12 = pneg %p11
  $region11: #{reconstruction_loss.1} parent=0 // pred_check_branch
    %14 = sbr.rel (%p12) target = $region13
  $region12: #{reconstruction_loss.1} parent=0 // pred_region
    %15 = vst [vmem:[%s2] sm:$0xff] 0.0
  $region13: #{reconstruction_loss.1} parent=0 // pred_fallthru
    _
  %v16 = vld [vmem:[%s2] sm:$0xff]
  %v17 = vld [vmem:[%s0] sm:$0xff]
  %v18 = vld [vmem:[%s0 + $0x8] sm:$0xff]
  %v19 = vld [vmem:[%s1] sm:$0xff]
  %v20 = vld [vmem:[%s1 + $0x8] sm:$0xff]
  %v21 = vsub.f32 %v17, %v19
  %v22 = vsub.f32 %v18, %v20
  %v23 = vand.u32 2147483647, %v21
  %v24 = vand.u32 2147483647, %v22
  %27 = vst [vmem:[#allocation1] ss:$4 sm:$0xff] %v23
  %s28 = scalar_lea.vmem [#allocation1], 32
  %29 = vst [vmem:[%s28] ss:$4 sm:$0xff] %v24
  %v30 = vld.sshfl [vmem:[#allocation1] sm:$0xff pattern:$0x73625140]
  %v31 = vld.sshfl [vmem:[#allocation1 + $0x8] sm:$0xff pattern:$0x73625140]
  %v32 = vld.sshfl [vmem:[#allocation1 + $0x10] sm:$0xff pattern:$0x73625140]
  %v33 = vld.sshfl [vmem:[#allocation1 + $0x18] sm:$0xff pattern:$0x73625140]
  %v34 = vld.sshfl [vmem:[#allocation1 + $0x20] sm:$0xff pattern:$0x73625140]
  %v35 = vld.sshfl [vmem:[#allocation1 + $0x28] sm:$0xff pattern:$0x73625140]
  %v36 = vld.sshfl [vmem:[#allocation1 + $0x30] sm:$0xff pattern:$0x73625140]
  %v37 = vld.sshfl [vmem:[#allocation1 + $0x38] sm:$0xff pattern:$0x73625140]
  %vm46 = vcmask 1041408
  %v47 = vsel %vm46, %v30, 0.0
  %v48 = vrot.slane %v47, 4
  %v49 = vadd.f32 %v47, %v48
  %v50 = vrot.slane %v49, 2
  %v51 = vadd.f32 %v49, %v50
  %v52 = vrot.slane %v51, 1
  %v53 = vadd.f32 %v51, %v52
  %v54 = vsel %vm46, %v31, 0.0
  %v55 = vrot.slane %v54, 4
  %v56 = vadd.f32 %v54, %v55
  %v57 = vrot.slane %v56, 2
  %v58 = vadd.f32 %v56, %v57
  %v59 = vrot.slane %v58, 1
  %v60 = vadd.f32 %v58, %v59
  %v61 = vsel %vm46, %v32, 0.0
  %v62 = vrot.slane %v61, 4
  %v63 = vadd.f32 %v61, %v62
  %v64 = vrot.slane %v63, 2
  %v65 = vadd.f32 %v63, %v64
  %v66 = vrot.slane %v65, 1
  %v67 = vadd.f32 %v65, %v66
  %v68 = vsel %vm46, %v33, 0.0
  %v69 = vrot.slane %v68, 4
  %v70 = vadd.f32 %v68, %v69
  %v71 = vrot.slane %v70, 2
  %v72 = vadd.f32 %v70, %v71
  %v73 = vrot.slane %v72, 1
  %v74 = vadd.f32 %v72, %v73
  %v75 = vsel %vm46, %v34, 0.0
  %v76 = vrot.slane %v75, 4
  %v77 = vadd.f32 %v75, %v76
  %v78 = vrot.slane %v77, 2
  %v79 = vadd.f32 %v77, %v78
  %v80 = vrot.slane %v79, 1
  %v81 = vadd.f32 %v79, %v80
  %v82 = vsel %vm46, %v35, 0.0
  %v83 = vrot.slane %v82, 4
  %v84 = vadd.f32 %v82, %v83
  %v85 = vrot.slane %v84, 2
  %v86 = vadd.f32 %v84, %v85
  %v87 = vrot.slane %v86, 1
  %v88 = vadd.f32 %v86, %v87
  %v89 = vsel %vm46, %v36, 0.0
  %v90 = vrot.slane %v89, 4
  %v91 = vadd.f32 %v89, %v90
  %v92 = vrot.slane %v91, 2
  %v93 = vadd.f32 %v91, %v92
  %v94 = vrot.slane %v93, 1
  %v95 = vadd.f32 %v93, %v94
  %v96 = vsel %vm46, %v37, 0.0
  %v97 = vrot.slane %v96, 4
  %v98 = vadd.f32 %v96, %v97
  %v99 = vrot.slane %v98, 2
  %v100 = vadd.f32 %v98, %v99
  %v101 = vrot.slane %v100, 1
  %v102 = vadd.f32 %v100, %v101
  %v111 = vrot.slane %v60, 7
  %v112 = vrot.slane %v67, 6
  %v113 = vrot.slane %v74, 5
  %v114 = vrot.slane %v81, 4
  %v115 = vrot.slane %v88, 3
  %v116 = vrot.slane %v95, 2
  %v117 = vrot.slane %v102, 1
  %vm118 = vcmask 1040384
  %v119 = vsel %vm118, %v53, %v111
  %vm120 = vcmask 1042434
  %v121 = vsel %vm120, %v112, %v113
  %v122 = vsel %vm46, %v119, %v121
  %vm123 = vcmask 1044484
  %v124 = vsel %vm123, %v114, %v115
  %vm125 = vcmask 1046534
  %v126 = vsel %vm125, %v116, %v117
  %vm127 = vcmask 1045508
  %v128 = vsel %vm127, %v124, %v126
  %vm129 = vcmask 1043456
  %v130 = vsel %vm129, %v122, %v128
  %v132 = vadd.f32 %v16, %v130
  %133 = vst [vmem:[%s2] sm:$0xff] %v132
  // Predicated region
  $region14: #{reconstruction_loss.1} parent=0 // pred_check
    _
  $region15: #{reconstruction_loss.1} parent=0 // pred_check_branch
    %135 = sbr.rel (0) target = $region17
  $region16: #{reconstruction_loss.1} parent=0 // pred_region
    _
  $region17: #{reconstruction_loss.1} parent=0 // pred_fallthru
    _
  // Predicated region
  $region18: #{reconstruction_loss.1} parent=0 // pred_check
    _
  $region19: #{reconstruction_loss.1} parent=0 // pred_check_branch
    %137 = sbr.rel (0) target = $region21
  $region20: #{reconstruction_loss.1} parent=0 // pred_region
    _
  $region21: #{reconstruction_loss.1} parent=0 // pred_fallthru
    _

</llo_original>
